<compile_context>
chip_gen: v7x
topology: tpu7x:2x2x1
jax: 0.10.0
libtpu: 0.0.40
codegen_flags: <defaults>
</compile_context>

<pallas_src>
import functools

import jax
import jax.numpy as jnp
from jax.experimental import pallas as pl
from jax.experimental.pallas import tpu as pltpu

# ---- static configuration (mirrors LayerEpilogue.__init__ flags) -------------
NUM_CHANNELS = 4
DLATENT_SIZE = 32
USE_WSCALE = True
USE_PIXEL_NORM = True
USE_INSTANCE_NORM = True
USE_NOISE = True
USE_STYLES = True
NONLINEARITY = "lrelu"          # 'relu' | 'lrelu'

PIXEL_NORM_EPS = 1e-8
INSTANCE_NORM_EPS = 1e-5
LRELU_SLOPE = 0.2


# ---- Pallas kernel ------------------------------------------------------------
def _epilogue_kernel(x_ref, noise_ref, nw_ref, sb_ref, o_ref):
    # x: (bt, C, HW) bf16 | noise: (bt, 1, HW) bf16 | nw: (1, C, 1) f32
    # sb: (bt, C, 2) f32 packed (scale, bias)       | o: (bt, C, HW) bf16
    x = x_ref[...].astype(jnp.float32)

    if USE_NOISE:
        n = noise_ref[...].astype(jnp.float32)               # (bt, 1, HW)
        x = x + nw_ref[...] * n                              # per-channel weight * per-batch noise

    if NONLINEARITY == "lrelu":
        x = jnp.maximum(x, LRELU_SLOPE * x)                  # mul + max (no cmp/select)
    else:
        x = jnp.maximum(x, 0.0)

    if USE_PIXEL_NORM:
        # Channel mean = cross-sublane reduce within each batch slab (exact f32,
        # XLU slot), then broadcast back along the sublane axis.
        ms = jnp.mean(x * x, axis=1, keepdims=True)          # (bt, 1, HW)
        x = x * jax.lax.rsqrt(ms + PIXEL_NORM_EPS)

    # Instance norm (biased variance over the spatial / lane axis) fused with the
    # style affine into a single per-(b, c) scale/shift -> one mul+add on the slab.
    if USE_INSTANCE_NORM:
        mu = jnp.mean(x, axis=2, keepdims=True)              # (bt, C, 1)
        ex2 = jnp.mean(x * x, axis=2, keepdims=True)         # (bt, C, 1)
        inv = jax.lax.rsqrt(ex2 - mu * mu + INSTANCE_NORM_EPS)
    else:
        mu = jnp.zeros((1, 1, 1), jnp.float32)
        inv = jnp.ones((1, 1, 1), jnp.float32)

    if USE_STYLES:
        scale = sb_ref[:, :, 0:1] + 1.0                      # (bt, C, 1)
        bias = sb_ref[:, :, 1:2]                             # (bt, C, 1)
    else:
        scale = jnp.ones((1, 1, 1), jnp.float32)
        bias = jnp.zeros((1, 1, 1), jnp.float32)

    if USE_INSTANCE_NORM or USE_STYLES:
        a = inv * scale                                      # (bt, C, 1)
        b = bias - mu * a
        x = x * a + b

    o_ref[...] = x.astype(o_ref.dtype)


# ---- tiling heuristics ----------------------------------------------------------
def _pick_batch_tile(B, C, HW, itemsize=2, target_block_bytes=2 << 20, min_steps=4):
    """Largest divisor of B whose bf16 x block stays ~target_block_bytes, then shrink
    until the grid has >= min(min_steps, B) steps (software pipelining + v7x megacore)."""
    per_batch = C * HW * itemsize
    divisors = sorted(d for d in range(1, B + 1) if B % d == 0)
    fitting = [d for d in divisors if d * per_batch <= target_block_bytes]
    bt = max(fitting) if fitting else 1
    want = min(min_steps, B)
    while B // bt < want:
        smaller = [d for d in divisors if d < bt]
        if not smaller:
            break
        bt = smaller[-1]
    return bt


# ---- wrapper --------------------------------------------------------------------
@functools.partial(jax.jit, static_argnames=("batch_tile",))
def layer_epilogue(x_nchw, noise, noise_weight, dlatent, style_w, style_b,
                   *, batch_tile=None):
    """x_nchw: (B, C, H, W), noise: (B, 1, H, W), noise_weight: (C,),
    dlatent: (B, D), style_w: (2C, D) (wscale folded in), style_b: (2C,)."""
    B, C, H, W = x_nchw.shape
    HW = H * W

    # bf16 HBM I/O; compute stays f32 inside the kernel.
    x3 = x_nchw.reshape(B, C, HW).astype(jnp.bfloat16)
    noise3 = noise.reshape(B, 1, HW).astype(jnp.bfloat16)
    nw = noise_weight.reshape(1, C, 1).astype(jnp.float32)

    # Style Linear hoisted out of the kernel: one (B, D) @ (D, 2C) matmul.
    s = jnp.dot(dlatent, style_w.T, precision=jax.lax.Precision.HIGHEST) + style_b[None, :]
    sb = jnp.stack([s[:, :C], s[:, C:]], axis=-1).astype(jnp.float32)      # (B, C, 2)

    if batch_tile is None:
        batch_tile = _pick_batch_tile(B, C, HW)
    assert B % batch_tile == 0
    grid = (B // batch_tile,)

    # VMEM budget: double-buffered bf16 in/out x blocks + ~4 f32 slab temporaries
    # + the (sublane-padded) noise block; clamp under v5e/v7x scoped-VMEM ceilings.
    cp16 = -(-C // 16) * 16
    cp8 = -(-C // 8) * 8
    vmem_est = (4 * batch_tile * cp16 * HW * 2
                + 4 * batch_tile * cp8 * HW * 4
                + 2 * batch_tile * 16 * HW * 2
                + (2 << 20))
    vmem_limit = int(min(max(vmem_est, 32 << 20), 48 << 20))

    out = pl.pallas_call(
        _epilogue_kernel,
        out_shape=jax.ShapeDtypeStruct((B, C, HW), jnp.bfloat16),
        grid_spec=pltpu.PrefetchScalarGridSpec(
            num_scalar_prefetch=0,
            grid=grid,
            in_specs=[
                pl.BlockSpec((batch_tile, C, HW), lambda i: (i, 0, 0)),   # x
                pl.BlockSpec((batch_tile, 1, HW), lambda i: (i, 0, 0)),   # per-batch noise
                pl.BlockSpec((1, C, 1), lambda i: (0, 0, 0)),             # noise weights (const, DMA'd once)
                pl.BlockSpec((batch_tile, C, 2), lambda i: (i, 0, 0)),    # packed style (scale, bias)
            ],
            out_specs=pl.BlockSpec((batch_tile, C, HW), lambda i: (i, 0, 0)),
        ),
        compiler_params=pltpu.CompilerParams(
            dimension_semantics=("parallel",),
            vmem_limit_bytes=vmem_limit,
        ),
        input_output_aliases={0: 0},   # x block fully overwritten -> reuse its HBM buffer
    )(x3, noise3, nw, sb)
    return out.reshape(B, C, H, W)


# ---- pure-JAX reference for validation -----------------------------------------
def reference(x_nchw, noise, noise_weight, dlatent, style_w, style_b):
    B, C, H, W = x_nchw.shape
    y = x_nchw.reshape(B, C, H * W).astype(jnp.float32)
    n = noise.reshape(B, 1, H * W).astype(jnp.float32)
    if USE_NOISE:
        y = y + noise_weight.reshape(1, C, 1) * n
    if NONLINEARITY == "lrelu":
        y = jnp.where(y > 0, y, LRELU_SLOPE * y)
    else:
        y = jnp.maximum(y, 0.0)
    if USE_PIXEL_NORM:
        y = y * jax.lax.rsqrt(jnp.mean(y * y, axis=1, keepdims=True) + PIXEL_NORM_EPS)
    if USE_INSTANCE_NORM:
        mu = jnp.mean(y, axis=2, keepdims=True)
        var = jnp.mean((y - mu) ** 2, axis=2, keepdims=True)
        y = (y - mu) * jax.lax.rsqrt(var + INSTANCE_NORM_EPS)
    if USE_STYLES:
        s = dlatent @ style_w.T + style_b.reshape(1, -1)     # (B, 2C)
        y = y * (s[:, :C].reshape(B, C, 1) + 1.0) + s[:, C:].reshape(B, C, 1)
    return y.reshape(B, C, H, W)


if __name__ == "__main__":
    def check(B, C, H, W, D):
        key = jax.random.PRNGKey(0)
        k_x, k_n, k_nw, k_d, k_w = jax.random.split(key, 5)

        x = jax.random.normal(k_x, (B, C, H, W), jnp.float32)
        # NoiseMixin draws fresh N(0,1) noise per call in PyTorch; generated in glue here.
        noise = jax.random.normal(k_n, (B, 1, H, W), jnp.float32)
        # PyTorch inits the noise weight to zeros; small nonzero values exercise the path.
        noise_weight = 0.1 * jax.random.normal(k_nw, (C,), jnp.float32)
        dlatent = jax.random.normal(k_d, (B, D), jnp.float32)

        # StyleMixin linear: weight (2C, D), bias (2C,); equalized-lr scale folded in.
        raw_w = jax.random.normal(k_w, (2 * C, D), jnp.float32)
        wscale = (1.0 / jnp.sqrt(jnp.float32(D))) if USE_WSCALE else jnp.float32(1.0)
        style_w = raw_w * wscale
        style_b = jnp.zeros((2 * C,), jnp.float32)

        out = jax.block_until_ready(
            layer_epilogue(x, noise, noise_weight, dlatent, style_w, style_b))

        # Reference computed from the same bf16-cast activations/noise the kernel
        # reads, so the comparison isolates kernel math from the intended bf16 I/O.
        x_b = x.astype(jnp.bfloat16).astype(jnp.float32)
        n_b = noise.astype(jnp.bfloat16).astype(jnp.float32)
        ref = reference(x_b, n_b, noise_weight, dlatent, style_w, style_b)
        assert jnp.allclose(out.astype(jnp.float32), ref, atol=5e-2, rtol=5e-2), \
            f"Pallas kernel mismatch vs reference at shape {(B, C, H, W)}"

    # Module-implied toy shape.
    check(B=2, C=NUM_CHANNELS, H=16, W=16, D=DLATENT_SIZE)
    # Larger batch: exercises the multi-step batch-tiled grid (pipelining / megacore path).
    check(B=8, C=NUM_CHANNELS, H=32, W=32, D=DLATENT_SIZE)

    print("KERNEL_OK")
</pallas_src>

<mosaic_0001>
module attributes {stable_mosaic.version = 11 : i64} {
  func.func @_epilogue_kernel(%arg0: i32, %arg1: memref<1x4x256xbf16, #tpu.memory_space<vmem>>, %arg2: memref<1x1x256xbf16, #tpu.memory_space<vmem>>, %arg3: memref<1x4x1xf32, #tpu.memory_space<vmem>>, %arg4: memref<1x4x2xf32, #tpu.memory_space<vmem>>, %arg5: memref<1x4x256xbf16, #tpu.memory_space<vmem>>) attributes {dimension_semantics = [#tpu.dimension_semantics<parallel>], iteration_bounds = array<i64: 2>, scalar_prefetch = 0 : i64, scratch_operands = 0 : i64, tpu.core_type = #tpu.core_type<tc>, window_params = [{transform_indices = @transform_0, window_bounds = array<i64: 1, 4, 256>}, {transform_indices = @transform_1, window_bounds = array<i64: 1, 1, 256>}, {pipeline_mode = #tpu.pipeline_mode<synchronous>, transform_indices = @transform_2, window_bounds = array<i64: 1, 4, 1>}, {transform_indices = @transform_3, window_bounds = array<i64: 1, 4, 2>}, {transform_indices = @transform_4, window_bounds = array<i64: 1, 4, 256>}]} {
    %c0 = arith.constant 0 : index
    %c0_0 = arith.constant 0 : index
    %c0_1 = arith.constant 0 : index
    %0 = vector.load %arg1[%c0, %c0_0, %c0_1] : memref<1x4x256xbf16, #tpu.memory_space<vmem>>, vector<1x4x256xbf16>
    %1 = arith.extf %0 : vector<1x4x256xbf16> to vector<1x4x256xf32>
    %c0_2 = arith.constant 0 : index
    %c0_3 = arith.constant 0 : index
    %c0_4 = arith.constant 0 : index
    %2 = vector.load %arg2[%c0_2, %c0_3, %c0_4] : memref<1x1x256xbf16, #tpu.memory_space<vmem>>, vector<1x1x256xbf16>
    %3 = arith.extf %2 : vector<1x1x256xbf16> to vector<1x1x256xf32>
    %c0_5 = arith.constant 0 : index
    %c0_6 = arith.constant 0 : index
    %c0_7 = arith.constant 0 : index
    %4 = vector.load %arg3[%c0_5, %c0_6, %c0_7] : memref<1x4x1xf32, #tpu.memory_space<vmem>>, vector<1x4x1xf32>
    %5 = vector.broadcast %4 : vector<1x4x1xf32> to vector<1x4x256xf32>
    %6 = vector.broadcast %3 : vector<1x1x256xf32> to vector<1x4x256xf32>
    %7 = arith.mulf %5, %6 : vector<1x4x256xf32>
    %8 = arith.addf %1, %7 : vector<1x4x256xf32>
    %cst = arith.constant 2.000000e-01 : f32
    %9 = vector.broadcast %cst : f32 to vector<1x4x256xf32>
    %10 = arith.mulf %9, %8 : vector<1x4x256xf32>
    %11 = arith.maximumf %8, %10 : vector<1x4x256xf32>
    %12 = arith.mulf %11, %11 : vector<1x4x256xf32>
    %cst_8 = arith.constant dense<0.000000e+00> : vector<1x256xf32>
    %13 = vector.multi_reduction <add>, %12, %cst_8 [1] : vector<1x4x256xf32> to vector<1x256xf32>
    %14 = vector.shape_cast %13 : vector<1x256xf32> to vector<1x1x256xf32>
    %cst_9 = arith.constant 4.000000e+00 : f32
    %15 = vector.broadcast %cst_9 : f32 to vector<1x1x256xf32>
    %16 = arith.divf %14, %15 : vector<1x1x256xf32>
    %cst_10 = arith.constant 9.99999993E-9 : f32
    %17 = vector.broadcast %cst_10 : f32 to vector<1x1x256xf32>
    %18 = arith.addf %16, %17 : vector<1x1x256xf32>
    %19 = math.rsqrt %18 : vector<1x1x256xf32>
    %20 = vector.broadcast %19 : vector<1x1x256xf32> to vector<1x4x256xf32>
    %21 = arith.mulf %11, %20 : vector<1x4x256xf32>
    %cst_11 = arith.constant dense<0.000000e+00> : vector<1x4xf32>
    %22 = vector.multi_reduction <add>, %21, %cst_11 [2] : vector<1x4x256xf32> to vector<1x4xf32>
    %23 = vector.shape_cast %22 : vector<1x4xf32> to vector<1x4x1xf32>
    %cst_12 = arith.constant 2.560000e+02 : f32
    %24 = vector.broadcast %cst_12 : f32 to vector<1x4x1xf32>
    %25 = arith.divf %23, %24 : vector<1x4x1xf32>
    %26 = arith.mulf %21, %21 : vector<1x4x256xf32>
    %cst_13 = arith.constant dense<0.000000e+00> : vector<1x4xf32>
    %27 = vector.multi_reduction <add>, %26, %cst_13 [2] : vector<1x4x256xf32> to vector<1x4xf32>
    %28 = vector.shape_cast %27 : vector<1x4xf32> to vector<1x4x1xf32>
    %cst_14 = arith.constant 2.560000e+02 : f32
    %29 = vector.broadcast %cst_14 : f32 to vector<1x4x1xf32>
    %30 = arith.divf %28, %29 : vector<1x4x1xf32>
    %31 = arith.mulf %25, %25 : vector<1x4x1xf32>
    %32 = arith.subf %30, %31 : vector<1x4x1xf32>
    %cst_15 = arith.constant 9.99999974E-6 : f32
    %33 = vector.broadcast %cst_15 : f32 to vector<1x4x1xf32>
    %34 = arith.addf %32, %33 : vector<1x4x1xf32>
    %35 = math.rsqrt %34 : vector<1x4x1xf32>
    %c0_16 = arith.constant 0 : index
    %c0_17 = arith.constant 0 : index
    %c0_18 = arith.constant 0 : index
    %36 = vector.load %arg4[%c0_16, %c0_17, %c0_18] : memref<1x4x2xf32, #tpu.memory_space<vmem>>, vector<1x4x1xf32>
    %cst_19 = arith.constant 1.000000e+00 : f32
    %37 = vector.broadcast %cst_19 : f32 to vector<1x4x1xf32>
    %38 = arith.addf %36, %37 : vector<1x4x1xf32>
    %c0_20 = arith.constant 0 : index
    %c0_21 = arith.constant 0 : index
    %c1 = arith.constant 1 : index
    %39 = vector.load %arg4[%c0_20, %c0_21, %c1] : memref<1x4x2xf32, #tpu.memory_space<vmem>>, vector<1x4x1xf32>
    %40 = arith.mulf %35, %38 : vector<1x4x1xf32>
    %41 = arith.mulf %25, %40 : vector<1x4x1xf32>
    %42 = arith.subf %39, %41 : vector<1x4x1xf32>
    %43 = vector.broadcast %40 : vector<1x4x1xf32> to vector<1x4x256xf32>
    %44 = arith.mulf %21, %43 : vector<1x4x256xf32>
    %45 = vector.broadcast %42 : vector<1x4x1xf32> to vector<1x4x256xf32>
    %46 = arith.addf %44, %45 : vector<1x4x256xf32>
    %47 = arith.truncf %46 : vector<1x4x256xf32> to vector<1x4x256xbf16>
    %c0_22 = arith.constant 0 : index
    %c0_23 = arith.constant 0 : index
    %c0_24 = arith.constant 0 : index
    %48 = vector.load %arg5[%c0_22, %c0_23, %c0_24] : memref<1x4x256xbf16, #tpu.memory_space<vmem>>, vector<1x4x256xbf16>
    tpu.vector_store %arg5[%c0_22, %c0_23, %c0_24], %47 {strides = array<i32>} : memref<1x4x256xbf16, #tpu.memory_space<vmem>>, vector<1x4x256xbf16>,
    return
  }
  func.func @transform_0(%arg0: i32) -> (i32, i32, i32) {
    %c0_i32 = arith.constant 0 : i32
    %c0_i32_0 = arith.constant 0 : i32
    %c0_i32_1 = arith.constant 0 : i32
    return %arg0, %c0_i32, %c0_i32_0 : i32, i32, i32
  }
  func.func @transform_1(%arg0: i32) -> (i32, i32, i32) {
    %c0_i32 = arith.constant 0 : i32
    %c0_i32_0 = arith.constant 0 : i32
    %c0_i32_1 = arith.constant 0 : i32
    return %arg0, %c0_i32, %c0_i32_0 : i32, i32, i32
  }
  func.func @transform_2(%arg0: i32) -> (i32, i32, i32) {
    %c0_i32 = arith.constant 0 : i32
    %c0_i32_0 = arith.constant 0 : i32
    %c0_i32_1 = arith.constant 0 : i32
    %c0_i32_2 = arith.constant 0 : i32
    return %c0_i32, %c0_i32_0, %c0_i32_1 : i32, i32, i32
  }
  func.func @transform_3(%arg0: i32) -> (i32, i32, i32) {
    %c0_i32 = arith.constant 0 : i32
    %c0_i32_0 = arith.constant 0 : i32
    %c0_i32_1 = arith.constant 0 : i32
    return %arg0, %c0_i32, %c0_i32_0 : i32, i32, i32
  }
  func.func @transform_4(%arg0: i32) -> (i32, i32, i32) {
    %c0_i32 = arith.constant 0 : i32
    %c0_i32_0 = arith.constant 0 : i32
    %c0_i32_1 = arith.constant 0 : i32
    return %arg0, %c0_i32, %c0_i32_0 : i32, i32, i32
  }
}

</mosaic_0001>

<llo_original>
// kernel: layer_epilogue.1
$region0: #{layer_epilogue.1}
  #allocation0 [shape = 'u32[]', space=smem, size = 0x4, offset = 0x4, fixed_abs, tag = 'smem constant byte address 0x4 - core index']
  #allocation1 [shape = 'u32[144,128]{1,0:T(1,128)}', space=vmem, size = 0x12000, scoped, tag = 'internal scratch']
  %s0 = inlined_call_operand.vmem [shape: bf16[2,4,256], index: 0, kind: input, shape index: {}, may-alias: {0,4}]
  %s1 = inlined_call_operand.vmem [shape: bf16[2,1,256], index: 1, kind: input, shape index: {}]
  %s2 = inlined_call_operand.vmem [shape: f32[1,4,1], index: 2, kind: input, shape index: {}]
  %s3 = inlined_call_operand.vmem [shape: f32[2,4,2], index: 3, kind: input, shape index: {}]
  %s4 = inlined_call_operand.vmem [shape: bf16[2,4,256], index: 4, kind: output, shape index: {}, may-alias: {0,4}]
  %s5 = sld [smem:[#allocation0]]
  $region49: #{layer_epilogue.1} parent=0
    _
  %s7 = ssub.s32 1, %s5
  %s8 = scalar_select 0, %s7, %s5
  loop: start=0, step=1, limit=4
  $region2: #{layer_epilogue.1} parent=0 // loop_pre_header
    _
  $region3: #{layer_epilogue.1} parent=0 // loop_header
    %s10 = sphi 0, %s14
    %p11 = scmp.ge.s32.totalorder %s10, 4
    %s20 = sphi 0, %s22
    %s23 = sphi 0, %s20
    %s24 = sphi 0, %s23
    %s40 = sphi 0, %s24
    %s46 = sphi 0, %s48
    %s49 = sphi 0, %s46
    %s50 = sphi 0, %s49
    %s66 = sphi 0, %s50
    %s70 = sphi 0, %s70
    %s72 = sphi 0, %s70
    %s73 = sphi 0, %s72
    %s87 = sphi 0, %s73
    %s93 = sphi 0, %s95
    %s96 = sphi 0, %s93
    %s97 = sphi 0, %s96
    %s113 = sphi 0, %s97
    %s119 = sphi 0, %s121
    %s122 = sphi 0, %s119
    %s123 = sphi 0, %s122
    %s139 = sphi 0, %s123
  $region4: #{layer_epilogue.1} parent=0 // loop_header_branch
    %13 = sbr.rel (%p11) target = $region8
  $region5: #{layer_epilogue.1} parent=0 // loop_body
    %s15 = ssub.s32 %s10, 1
    %s16 = ssub.s32 %s10, 2
    %s17 = sadd.s32 %s10, 1
    %s18 = ssub.s32 %s10, %s17
    %p19 = scmp.eq.s32.totalorder %s18, 0
    %s21 = sadd.s32 %s20, 1
    %s22 = scalar_select %p19, %s20, %s21
    %p25 = pneg %p19
    %p26 = scmp.eq.s32.totalorder %s10, 1
    %p27 = por %p25, %p26
    %p28 = scmp.ne.s32.totalorder %s20, %s23
    %p29 = scmp.eq.s32.totalorder %s10, 0
    %p30 = por %p28, %p29
    %p31 = scmp.ne.s32.totalorder %s20, %s23
    %p32 = scmp.eq.s32.totalorder %s15, 1
    %p33 = por %p31, %p32
    %p34 = scmp.ne.s32.totalorder %s23, %s24
    %p35 = scmp.eq.s32.totalorder %s15, 0
    %p36 = por %p34, %p35
    %p37 = scmp.ne.s32.totalorder %s23, %s24
    %p38 = scmp.eq.s32.totalorder %s16, 1
    %p39 = por %p37, %p38
    %p41 = scmp.ne.s32.totalorder %s24, %s40
    %p42 = scmp.eq.s32.totalorder %s16, 0
    %p43 = por %p41, %p42
    %s44 = ssub.s32 %s10, %s17
    %p45 = scmp.eq.s32.totalorder %s44, 0
    %s47 = sadd.s32 %s46, 1
    %s48 = scalar_select %p45, %s46, %s47
    %p51 = pneg %p45
    %p52 = scmp.eq.s32.totalorder %s10, 1
    %p53 = por %p51, %p52
    %p54 = scmp.ne.s32.totalorder %s46, %s49
    %p55 = scmp.eq.s32.totalorder %s10, 0
    %p56 = por %p54, %p55
    %p57 = scmp.ne.s32.totalorder %s46, %s49
    %p58 = scmp.eq.s32.totalorder %s15, 1
    %p59 = por %p57, %p58
    %p60 = scmp.ne.s32.totalorder %s49, %s50
    %p61 = scmp.eq.s32.totalorder %s15, 0
    %p62 = por %p60, %p61
    %p63 = scmp.ne.s32.totalorder %s49, %s50
    %p64 = scmp.eq.s32.totalorder %s16, 1
    %p65 = por %p63, %p64
    %p67 = scmp.ne.s32.totalorder %s50, %s66
    %p68 = scmp.eq.s32.totalorder %s16, 0
    %p69 = por %p67, %p68
    %s71 = sadd.s32 %s70, 1
    %p74 = scmp.eq.s32.totalorder %s10, 1
    %p75 = scmp.ne.s32.totalorder %s70, %s72
    %p76 = scmp.eq.s32.totalorder %s10, 0
    %p77 = por %p75, %p76
    %p78 = scmp.ne.s32.totalorder %s70, %s72
    %p79 = scmp.eq.s32.totalorder %s15, 1
    %p80 = por %p78, %p79
    %p81 = scmp.ne.s32.totalorder %s72, %s73
    %p82 = scmp.eq.s32.totalorder %s15, 0
    %p83 = por %p81, %p82
    %p84 = scmp.ne.s32.totalorder %s72, %s73
    %p85 = scmp.eq.s32.totalorder %s16, 1
    %p86 = por %p84, %p85
    %p88 = scmp.ne.s32.totalorder %s73, %s87
    %p89 = scmp.eq.s32.totalorder %s16, 0
    %p90 = por %p88, %p89
    %s91 = ssub.s32 %s10, %s17
    %p92 = scmp.eq.s32.totalorder %s91, 0
    %s94 = sadd.s32 %s93, 1
    %s95 = scalar_select %p92, %s93, %s94
    %p98 = pneg %p92
    %p99 = scmp.eq.s32.totalorder %s10, 1
    %p100 = por %p98, %p99
    %p101 = scmp.ne.s32.totalorder %s93, %s96
    %p102 = scmp.eq.s32.totalorder %s10, 0
    %p103 = por %p101, %p102
    %p104 = scmp.ne.s32.totalorder %s93, %s96
    %p105 = scmp.eq.s32.totalorder %s15, 1
    %p106 = por %p104, %p105
    %p107 = scmp.ne.s32.totalorder %s96, %s97
    %p108 = scmp.eq.s32.totalorder %s15, 0
    %p109 = por %p107, %p108
    %p110 = scmp.ne.s32.totalorder %s96, %s97
    %p111 = scmp.eq.s32.totalorder %s16, 1
    %p112 = por %p110, %p111
    %p114 = scmp.ne.s32.totalorder %s97, %s113
    %p115 = scmp.eq.s32.totalorder %s16, 0
    %p116 = por %p114, %p115
    %s117 = ssub.s32 %s10, %s17
    %p118 = scmp.eq.s32.totalorder %s117, 0
    %s120 = sadd.s32 %s119, 1
    %s121 = scalar_select %p118, %s119, %s120
    %p124 = pneg %p118
    %p125 = scmp.eq.s32.totalorder %s10, 1
    %p126 = por %p124, %p125
    %p127 = scmp.ne.s32.totalorder %s119, %s122
    %p128 = scmp.eq.s32.totalorder %s10, 0
    %p129 = por %p127, %p128
    %p130 = scmp.ne.s32.totalorder %s119, %s122
    %p131 = scmp.eq.s32.totalorder %s15, 1
    %p132 = por %p130, %p131
    %p133 = scmp.ne.s32.totalorder %s122, %s123
    %p134 = scmp.eq.s32.totalorder %s15, 0
    %p135 = por %p133, %p134
    %p136 = scmp.ne.s32.totalorder %s122, %s123
    %p137 = scmp.eq.s32.totalorder %s16, 1
    %p138 = por %p136, %p137
    %p140 = scmp.ne.s32.totalorder %s123, %s139
    %p141 = scmp.eq.s32.totalorder %s16, 0
    %p142 = por %p140, %p141
    %p143 = scmp.le.s32.totalorder 1, %s10
    %p144 = scmp.lt.s32.totalorder %s10, 3
    %p145 = pnand %p143, %p144
    %p146 = pneg %p145
    // Predicated region
    $region9: #{layer_epilogue.1} parent=5 // pred_check
      _
    $region10: #{layer_epilogue.1} parent=5 // pred_check_branch
      %148 = sbr.rel (%p145) target = $region12
    $region11: #{layer_epilogue.1} parent=5 // pred_region
      %s149 = ssub.s32 %s10, 1
      // Predicated region
      $region13: #{layer_epilogue.1} parent=11 // pred_check
        %p150 = pneg %p83
      $region14: #{layer_epilogue.1} parent=11 // pred_check_branch
        %152 = sbr.rel (%p150) target = $region16
      $region15: #{layer_epilogue.1} parent=11 // pred_region
        _
      $region16: #{layer_epilogue.1} parent=11 // pred_fallthru
        _
    $region12: #{layer_epilogue.1} parent=5 // pred_fallthru
      _
    %p153 = scmp.lt.s32.totalorder %s10, 2
    // Predicated region
    $region17: #{layer_epilogue.1} parent=5 // pred_check
      %p154 = pneg %p153
    $region18: #{layer_epilogue.1} parent=5 // pred_check_branch
      %156 = sbr.rel (%p154) target = $region20
    $region19: #{layer_epilogue.1} parent=5 // pred_region
      // Predicated region
      $region21: #{layer_epilogue.1} parent=19 // pred_check
        %p157 = pneg %p30
      $region22: #{layer_epilogue.1} parent=19 // pred_check_branch
        %159 = sbr.rel (%p157) target = $region24
      $region23: #{layer_epilogue.1} parent=19 // pred_region
        %p160 = scmp.lt.s32.totalorder %s10, 1
        %s161 = scalar_select %p160, %s10, 1
        %s162 = smul.addr %s161, 2
        %s163 = smul.addr %s162, 2
        %s164 = scalar_lea.vmem %s0, %s163
      $region24: #{layer_epilogue.1} parent=19 // pred_fallthru
        _
      // Predicated region
      $region25: #{layer_epilogue.1} parent=19 // pred_check
        %p165 = pneg %p56
      $region26: #{layer_epilogue.1} parent=19 // pred_check_branch
        %167 = sbr.rel (%p165) target = $region28
      $region27: #{layer_epilogue.1} parent=19 // pred_region
        %p168 = scmp.lt.s32.totalorder %s10, 1
        %s169 = scalar_select %p168, %s10, 1
        %s170 = smul.addr %s169, 2
        %s171 = scalar_lea.vmem %s1, %s170
      $region28: #{layer_epilogue.1} parent=19 // pred_fallthru
        _
      // Predicated region
      $region29: #{layer_epilogue.1} parent=19 // pred_check
        %p172 = pneg %p103
      $region30: #{layer_epilogue.1} parent=19 // pred_check_branch
        %174 = sbr.rel (%p172) target = $region32
      $region31: #{layer_epilogue.1} parent=19 // pred_region
        %p175 = scmp.lt.s32.totalorder %s10, 1
        %s176 = scalar_select %p175, %s10, 1
        %s177 = smul.addr %s176, 4
        %s178 = scalar_lea.vmem %s3, %s177
      $region32: #{layer_epilogue.1} parent=19 // pred_fallthru
        _
    $region20: #{layer_epilogue.1} parent=5 // pred_fallthru
      _
    %p179 = scmp.le.s32.totalorder 1, %s10
    %p180 = scmp.lt.s32.totalorder %s10, 3
    %p181 = pnand %p179, %p180
    %p182 = pneg %p181
    // Predicated region
    $region33: #{layer_epilogue.1} parent=5 // pred_check
      _
    $region34: #{layer_epilogue.1} parent=5 // pred_check_branch
      %184 = sbr.rel (%p181) target = $region36
    $region35: #{layer_epilogue.1} parent=5 // pred_region
      %s185 = ssub.s32 %s10, 1
      %p186 = scmp.lt.s32.totalorder %s15, 1
      %s187 = scalar_select %p186, %s15, 1
      %s188 = smul.addr %s187, 2
      %s189 = smul.addr %s188, 2
      %s190 = scalar_lea.vmem %s0, %s189
      %p191 = pneg %p36
      %p192 = pneg %p33
      %p193 = scmp.lt.s32.totalorder %s15, 1
      %s194 = scalar_select %p193, %s15, 1
      %s195 = smul.addr %s194, 2
      %s196 = scalar_lea.vmem %s1, %s195
      %p197 = pneg %p62
      %p198 = pneg %p59
      %p199 = pneg %p83
      %p200 = pneg %p80
      %p201 = scmp.lt.s32.totalorder %s15, 1
      %s202 = scalar_select %p201, %s15, 1
      %s203 = smul.addr %s202, 4
      %s204 = scalar_lea.vmem %s3, %s203
      %p205 = pneg %p109
      %p206 = pneg %p106
      %p207 = pneg %p135
      %p208 = pneg %p132
      %p209 = scmp.lt.s32.totalorder %s15, 1
      %s210 = scalar_select %p209, %s15, 1
      %s211 = smul.addr %s210, 2
      %s212 = smul.addr %s211, 2
      %s213 = scalar_lea.vmem %s4, %s212
      %p214 = scmp.lt.s32.totalorder %s15, 1
      %s215 = scalar_select %p214, %s15, 1
      %s216 = smul.addr %s215, 2
      %s217 = smul.addr %s216, 2
      %s218 = scalar_lea.vmem %s0, %s217
      %p219 = scmp.lt.s32.totalorder %s15, 1
      %s220 = scalar_select %p219, %s15, 1
      %s221 = smul.addr %s220, 2
      %s222 = scalar_lea.vmem %s1, %s221
      %p223 = scmp.lt.s32.totalorder %s15, 1
      %s224 = scalar_select %p223, %s15, 1
      %s225 = smul.addr %s224, 4
      %s226 = scalar_lea.vmem %s3, %s225
      %p227 = scmp.lt.s32.totalorder %s15, 1
      %s228 = scalar_select %p227, %s15, 1
      %s229 = smul.addr %s228, 2
      %s230 = smul.addr %s229, 2
      %s231 = scalar_lea.vmem %s4, %s230
      %v232 = vld [vmem:[%s218] sm:$0xf]
      %v233 = vunpack.c.l.bf16 %v232
      %v234 = vld [vmem:[%s222] sm:$0x3]
      %v235 = vunpack.c.l.bf16 %v234
      %v236 = vld [vmem:[%s2] sm:$0xf]
      %238 = vset.pattern.permute.xlu0 0
      %239 = vperm.xlu0 %238, %v236
      %v240 = vpop.permute.xlu0 %239
      %v243 = vlaneseq
      %v244 = vshrl.u32 %v243, 7
      %v245 = vsub.s32 0, %v244
      %v246 = vrot.slane %v235, %v245
      %v247 = vlaneseq
      %v248 = vshrl.u32 %v247, 7
      %v249 = vsub.s32 2, %v248
      %v250 = vrot.slane %v235, %v249
      %v253 = vlaneseq
      %v254 = vshrl.u32 %v253, 7
      %v255 = vsub.s32 0, %v254
      %v256 = vrot.slane %v246, %v255
      %v257 = vlaneseq
      %v258 = vshrl.u32 %v257, 7
      %v259 = vsub.s32 0, %v258
      %v260 = vrot.slane %v250, %v259
      %v261 = vmul.f32 %v240, %v256
      %v262 = vmul.f32 %v240, %v260
      %v265 = vcombine.low %v261, %v262
      %v267 = vadd.f32 %v233, %v265
      %v268 = vmul.f32 %v267, 0.2
      %v269 = vmax.f32 %v267, %v268
      %v270 = vmul.f32 %v269, %v269
      %v272 = vcombine.high %v270, %v270
      %vm274 = vcmask 1043456
      %v275 = vsel %vm274, %v270, 0.0
      %v276 = vrot.slane %v275, 4
      %v277 = vadd.f32 %v275, %v276
      %v278 = vrot.slane %v277, 2
      %v279 = vadd.f32 %v277, %v278
      %v280 = vrot.slane %v279, 1
      %v281 = vadd.f32 %v279, %v280
      %v282 = vsel %vm274, %v272, 0.0
      %v283 = vrot.slane %v282, 4
      %v284 = vadd.f32 %v282, %v283
      %v285 = vrot.slane %v284, 2
      %v286 = vadd.f32 %v284, %v285
      %v287 = vrot.slane %v286, 1
      %v288 = vadd.f32 %v286, %v287
      %v289 = vrcp.pop 4.0
      %v290 = vmul.f32 %v281, %v289
      %v291 = vmul.f32 %v288, %v289
      %v292 = vadd.f32 %v290, 1e-08
      %v293 = vadd.f32 %v291, 1e-08
      %v294 = vrsqrt.pop %v292
      %v295 = vrsqrt.pop %v293
      %v298 = vcombine.low %v294, %v295
      %v300 = vmul.f32 %v269, %v298
      %v302 = vcombine.high %v300, %v300
      %v304 = vsel %vm274, %v300, 0.0
      %v305 = vsel %vm274, %v302, 0.0
      %v306 = vadd.f32 %v304, %v305
      %307 = vadd.xlane.f32.xlu0 %v306
      %v308 = vpop.xlane.xlu0 %307
      %v309 = vrcp.pop 256.0
      %v310 = vmul.f32 %v308, %v309
      %v311 = vmul.f32 %v300, %v300
      %v313 = vcombine.high %v311, %v311
      %v315 = vsel %vm274, %v311, 0.0
      %v316 = vsel %vm274, %v313, 0.0
      %v317 = vadd.f32 %v315, %v316
      %318 = vadd.xlane.f32.xlu0 %v317
      %v319 = vpop.xlane.xlu0 %318
      %v320 = vmul.f32 %v319, %v309
      %v321 = vmul.f32 %v310, %v310
      %v322 = vsub.f32 %v320, %v321
      %v323 = vadd.f32 %v322, 1e-05
      %v324 = vrsqrt.pop %v323
      %v325 = vld [vmem:[%s226] sm:$0xf]
      %v326 = vadd.f32 %v325, 1.0
      %v327 = vmul.f32 %v324, %v326
      %v328 = vmul.f32 %v310, %v327
      %330 = vrot.lane.b32.xlu0 %v328, 1
      %v331 = vpop.permute.xlu0 %330
      %v333 = vsub.f32 %v325, %v331
      %335 = vset.pattern.permute.xlu0 0
      %336 = vperm.xlu0 %335, %v327
      %v337 = vpop.permute.xlu0 %336
      %v339 = vunpack.c.l.s4 839922192
      %v340 = vunpack.c.0.s8 %v339
      %v341 = vlaneseq
      %v342 = vshrl.u32 %v341, 7
      %v343 = vsub.s32 %v340, %v342
      %v344 = vrot.slane %v337, %v343
      %v346 = vmul.f32 %v300, %v344
      %348 = vset.pattern.permute.xlu0 1
      %349 = vperm.xlu0 %348, %v333
      %v350 = vpop.permute.xlu0 %349
      %v352 = vunpack.c.l.s4 839922192
      %v353 = vunpack.c.0.s8 %v352
      %v354 = vlaneseq
      %v355 = vshrl.u32 %v354, 7
      %v356 = vsub.s32 %v353, %v355
      %v357 = vrot.slane %v350, %v356
      %v359 = vadd.f32 %v346, %v357
      %v361 = vcombine.high %v359, %v359
      %v363 = vpack.c.bf16 %v359, %v359
      %v364 = vpack.c.bf16 %v361, %v361
      %v367 = vcombine.low %v363, %v364
      %v369 = vunpack.c.l.s4 1983009808
      %v370 = vunpack.c.0.s8 %v369
      %v371 = vlaneseq
      %v372 = vshrl.u32 %v371, 7
      %v373 = vsub.s32 %v370, %v372
      %v374 = vrot.slane %v367, %v373
      %376 = vst [vmem:[%s231] sm:$0xf] %v374
      %p377 = scmp.lt.s32.totalorder %s15, 1
      %s378 = scalar_select %p377, %s15, 1
      %s379 = smul.addr %s378, 2
      %s380 = smul.addr %s379, 2
      %s381 = scalar_lea.vmem %s4, %s380
      // Predicated region
      $region37: #{layer_epilogue.1} parent=35 // pred_check
        %p382 = pneg %p132
      $region38: #{layer_epilogue.1} parent=35 // pred_check_branch
        %384 = sbr.rel (%p382) target = $region40
      $region39: #{layer_epilogue.1} parent=35 // pred_region
        _
      $region40: #{layer_epilogue.1} parent=35 // pred_fallthru
        _
    $region36: #{layer_epilogue.1} parent=5 // pred_fallthru
      _
    %p385 = scmp.le.s32.totalorder 2, %s10
    // Predicated region
    $region41: #{layer_epilogue.1} parent=5 // pred_check
      %p386 = pneg %p385
    $region42: #{layer_epilogue.1} parent=5 // pred_check_branch
      %388 = sbr.rel (%p386) target = $region44
    $region43: #{layer_epilogue.1} parent=5 // pred_region
      %s389 = ssub.s32 %s10, 2
      // Predicated region
      $region45: #{layer_epilogue.1} parent=43 // pred_check
        %p390 = pneg %p138
      $region46: #{layer_epilogue.1} parent=43 // pred_check_branch
        %392 = sbr.rel (%p390) target = $region48
      $region47: #{layer_epilogue.1} parent=43 // pred_region
        %p393 = scmp.lt.s32.totalorder %s16, 1
        %s394 = scalar_select %p393, %s16, 1
        %s395 = smul.addr %s394, 2
        %s396 = smul.addr %s395, 2
        %s397 = scalar_lea.vmem %s4, %s396
      $region48: #{layer_epilogue.1} parent=43 // pred_fallthru
        _
    $region44: #{layer_epilogue.1} parent=5 // pred_fallthru
      _
  $region6: #{layer_epilogue.1} parent=0 // loop_footer
    %s14 = sadd.s32 1, %s10
  $region7: #{layer_epilogue.1} parent=0 // loop_footer_branch
    %9 = sbr.rel target = $region3
  $region8: #{layer_epilogue.1} parent=0 // loop_exit
    _

</llo_original>
